<compile_context>
chip_gen: v5e
topology: v5e:2x2
jax: 0.10.0
libtpu: 0.0.40
codegen_flags: <defaults>
</compile_context>

<pallas_src>
import functools

import jax
import jax.numpy as jnp
import numpy as np
from jax.experimental import pallas as pl
from jax.experimental.pallas import tpu as pltpu

EPS = 1e-7


def _listmle_kernel(yt_ref, yp_ref, tri_ref, out_ref, *, min_sim_scaled, chunk):
    """yt_ref: y_true sorted descending (TB, N); yp_ref: preds gathered into
    that order (TB, N); tri_ref: (N, N) lower-triangular ones, VMEM-resident
    (constant block index => fetched once); out_ref: (1, N) lane-dense
    per-column partial sums of the observation loss for this row block."""
    tb, n = yt_ref.shape
    tri = tri_ref[...]                                  # (N, N), stays resident
    neg_big = jnp.float32(-1e30)
    thresh = jnp.float32(min_sim_scaled)
    n_chunks = tb // chunk

    def body(c, acc):
        r0 = pl.multiple_of(c * chunk, chunk)
        yt = yt_ref[pl.ds(r0, chunk), :]                # (chunk, N)
        yp = yp_ref[pl.ds(r0, chunk), :]                # (chunk, N)
        mask = yt < thresh                              # (chunk, N) bool

        # Row max over unmasked entries only; large-finite fill keeps
        # fully-masked (incl. padded) rows free of -inf / NaN arithmetic.
        max_v = jnp.max(jnp.where(mask, neg_big, yp), axis=-1, keepdims=True)
        pm = yp - max_v                                 # (chunk, N)
        # NOTE: exp(pm) can overflow on fully-masked (padded) rows; the select
        # keeps the inf out of all sums — do not convert this to a multiply.
        ex = jnp.where(mask, 0.0, jnp.exp(pm))          # masked -> 0 exactly

        # Reverse cumsum on the MXU: cums[:, j] = sum_{k >= j} ex[:, k].
        cums = jnp.dot(ex, tri, preferred_element_type=jnp.float32)
        obs = jnp.where(mask, 0.0, jnp.log(cums + EPS) - pm)

        return acc + jnp.sum(obs, axis=0, keepdims=True)  # (1, N)

    acc = jax.lax.fori_loop(0, n_chunks, body,
                            jnp.zeros((1, n), jnp.float32), unroll=True)
    out_ref[...] = acc


def listmle_with_drop(teacher_top1_sim_pred, student_top1_sim_pred, *,
                      tau=0.05, gamma_=0.10, min_sim=-1.0, temp=0.05,
                      perm_key=None, block_rows=256):
    # NOTE: `tau` / Similarity are constructed in the torch module but never
    # used in its forward; kept here only for signature parity.
    y_pred = student_top1_sim_pred.astype(jnp.float32)
    y_true = teacher_top1_sim_pred.astype(jnp.float32)
    B, N = y_pred.shape
    min_sim_scaled = float(min_sim) / float(temp)

    # ---- glue: shuffle (torch.randperm), descending sort by teacher, gather ----
    if perm_key is None:
        perm_key = jax.random.PRNGKey(0)
    perm = jax.random.permutation(perm_key, N)
    y_pred_s = y_pred[:, perm]
    y_true_s = y_true[:, perm]
    idx = jnp.argsort(-y_true_s, axis=-1)                       # descending order
    y_true_sorted = jnp.take_along_axis(y_true_s, idx, axis=-1)
    preds_sorted = jnp.take_along_axis(y_pred_s, idx, axis=-1)

    # ---- tiling: pad to TPU-friendly tiles; padded entries fully masked -> 0 loss ----
    n_pad = 128 * pl.cdiv(N, 128)
    b_pad8 = 8 * pl.cdiv(B, 8)
    tb = min(int(block_rows), b_pad8)                  # multiple of 8 by construction

    # v7x has 2 TensorCores and the grid axis is "parallel": keep >= 2 row
    # blocks whenever the (padded) batch allows it so neither core idles.
    if b_pad8 >= 16:
        tb = min(tb, max(8, ((b_pad8 // 2) // 8) * 8))

    # Size the block for the actual VMEM capacity (64 MiB on v7x, 128 MiB on
    # v5e/v6e) and raise the scoped limit explicitly (v5e default is 16 MiB).
    try:
        vmem_cap = int(pltpu.get_tpu_info().vmem_capacity_bytes)
    except Exception:  # conservative fallback = v7x per-core capacity
        vmem_cap = 64 * 1024 * 1024
    vmem_budget = (vmem_cap * 3) // 4
    tri_bytes = 2 * n_pad * n_pad * 4                  # conservatively double-buffered
    per_row_bytes = 2 * 2 * n_pad * 4                  # 2 inputs x 2 pipeline buffers
    avail = vmem_budget - tri_bytes - (4 << 20)        # margin for output / spills
    if avail > 0:
        tb = min(tb, max(8, ((avail // per_row_bytes) // 8) * 8))
    else:
        tb = 8
    # Inner row-chunking keeps live temporaries near the 64-vreg file; 128 rows
    # is the common-ground MXU M chunk (v5e native, half-fill on v6e/v7x).
    if tb > 128:
        tb = (tb // 128) * 128
        chunk = 128
    else:
        chunk = tb

    b_pad = tb * pl.cdiv(b_pad8, tb)
    num_blocks = b_pad // tb

    pad_val = min_sim_scaled - 1.0                     # below threshold -> masked
    if (b_pad != B) or (n_pad != N):
        y_true_sorted = jnp.pad(y_true_sorted, ((0, b_pad - B), (0, n_pad - N)),
                                constant_values=pad_val)
        preds_sorted = jnp.pad(preds_sorted, ((0, b_pad - B), (0, n_pad - N)),
                               constant_values=0.0)

    # Lower-triangular ones: tri[k, j] = (k >= j).  Built once in XLA, fetched
    # into VMEM exactly once (constant block index below).
    tri = (jnp.arange(n_pad, dtype=jnp.int32)[:, None]
           >= jnp.arange(n_pad, dtype=jnp.int32)[None, :]).astype(jnp.float32)

    kernel = functools.partial(_listmle_kernel,
                               min_sim_scaled=min_sim_scaled, chunk=chunk)

    cost = pl.CostEstimate(
        flops=2 * b_pad * n_pad * n_pad,               # reverse-cumsum matmul
        transcendentals=2 * b_pad * n_pad,             # exp + log
        bytes_accessed=(2 * b_pad * n_pad + n_pad * n_pad + num_blocks * n_pad) * 4,
    )

    partials = pl.pallas_call(
        kernel,
        out_shape=jax.ShapeDtypeStruct((num_blocks, n_pad), jnp.float32),
        grid=(num_blocks,),
        in_specs=[
            pl.BlockSpec((tb, n_pad), lambda i: (i, 0)),
            pl.BlockSpec((tb, n_pad), lambda i: (i, 0)),
            pl.BlockSpec((n_pad, n_pad), lambda i: (0, 0)),  # DMA'd once, resident
        ],
        out_specs=pl.BlockSpec((1, n_pad), lambda i: (i, 0)),  # lane-dense output
        compiler_params=pltpu.CompilerParams(
            dimension_semantics=("parallel",),
            vmem_limit_bytes=int(vmem_budget)),
        cost_estimate=cost,
    )(y_true_sorted, preds_sorted, tri)

    # gamma * mean(sum(observation_loss, dim=1)) over the *real* batch rows.
    return (float(gamma_) / float(B)) * jnp.sum(partials)


def _reference_loss(y_true_sorted, preds_sorted, min_sim_scaled, gamma_):
    """Pure-JAX mirror of the torch forward (post sort/gather), for validation."""
    mask = y_true_sorted < min_sim_scaled
    preds = jnp.where(mask, -jnp.inf, preds_sorted)
    max_v = preds.max(axis=1, keepdims=True)
    pm = preds - max_v
    cums = jnp.flip(jnp.cumsum(jnp.flip(jnp.exp(pm), axis=1), axis=1), axis=1)
    obs = jnp.log(cums + EPS) - pm
    obs = jnp.where(mask, 0.0, obs)
    return gamma_ * jnp.mean(jnp.sum(obs, axis=1))


def _reference_from_raw(teacher, student, perm_key, min_sim, temp, gamma_):
    perm = jax.random.permutation(perm_key, teacher.shape[-1])
    yt_s, yp_s = teacher[:, perm], student[:, perm]
    idx = jnp.argsort(-yt_s, axis=-1)
    return _reference_loss(jnp.take_along_axis(yt_s, idx, axis=-1),
                           jnp.take_along_axis(yp_s, idx, axis=-1),
                           min_sim / temp, gamma_)


if __name__ == "__main__":
    # Deterministic "hyper-parameters" (module __init__ args).
    tau, gamma_, min_sim, temp = 0.05, 0.10, -1.0, 0.05

    key = jax.random.PRNGKey(0)

    # --- case 1: aligned shapes (B=8 anchors, N=128 ranked candidates) ---
    B, N = 8, 128
    k_t, k_s, k_perm, key = jax.random.split(key, 4)
    # Temperature-scaled similarities live roughly in [-1/temp, 1/temp] = [-20, 20];
    # widen slightly so some entries fall below min_sim/temp and exercise the mask.
    teacher = jax.random.uniform(k_t, (B, N), jnp.float32, minval=-30.0, maxval=30.0)
    student = jax.random.uniform(k_s, (B, N), jnp.float32, minval=-30.0, maxval=30.0)

    loss = listmle_with_drop(teacher, student, tau=tau, gamma_=gamma_,
                             min_sim=min_sim, temp=temp, perm_key=k_perm)
    loss = jax.block_until_ready(loss)
    ref = _reference_from_raw(teacher, student, k_perm, min_sim, temp, gamma_)
    np.testing.assert_allclose(np.asarray(loss), np.asarray(ref), rtol=1e-4, atol=1e-5)

    # --- case 2: unaligned shapes (exercises the padding / masking path) ---
    B2, N2 = 6, 100
    k_t2, k_s2, k_perm2, key = jax.random.split(key, 4)
    teacher2 = jax.random.uniform(k_t2, (B2, N2), jnp.float32, minval=-30.0, maxval=30.0)
    student2 = jax.random.uniform(k_s2, (B2, N2), jnp.float32, minval=-30.0, maxval=30.0)

    loss2 = listmle_with_drop(teacher2, student2, tau=tau, gamma_=gamma_,
                              min_sim=min_sim, temp=temp, perm_key=k_perm2)
    loss2 = jax.block_until_ready(loss2)
    ref2 = _reference_from_raw(teacher2, student2, k_perm2, min_sim, temp, gamma_)
    np.testing.assert_allclose(np.asarray(loss2), np.asarray(ref2), rtol=1e-4, atol=1e-5)

    print("KERNEL_OK")
</pallas_src>

<mosaic_0001>
module attributes {stable_mosaic.version = 11 : i64} {
  func.func @_listmle_kernel(%arg0: i32, %arg1: memref<8x128xf32, #tpu.memory_space<vmem>>, %arg2: memref<8x128xf32, #tpu.memory_space<vmem>>, %arg3: memref<128x128xf32, #tpu.memory_space<vmem>>, %arg4: memref<1x128xf32, #tpu.memory_space<vmem>>) attributes {dimension_semantics = [#tpu.dimension_semantics<parallel>], iteration_bounds = array<i64: 1>, scalar_prefetch = 0 : i64, scratch_operands = 0 : i64, tpu.core_type = #tpu.core_type<tc>, window_params = [{transform_indices = @transform_0, window_bounds = array<i64: 8, 128>}, {transform_indices = @transform_1, window_bounds = array<i64: 8, 128>}, {pipeline_mode = #tpu.pipeline_mode<synchronous>, transform_indices = @transform_2, window_bounds = array<i64: 128, 128>}, {transform_indices = @transform_3, window_bounds = array<i64: 1, 128>}]} {
    %c0 = arith.constant 0 : index
    %c0_0 = arith.constant 0 : index
    %0 = vector.load %arg3[%c0, %c0_0] : memref<128x128xf32, #tpu.memory_space<vmem>>, vector<128x128xf32>
    %cst = arith.constant 0.000000e+00 : f32
    %1 = vector.broadcast %cst : f32 to vector<1x128xf32>
    %cst_1 = arith.constant -2.000000e+01 : f32
    %cst_2 = arith.constant -1.000000e+30 : f32
    %c0_i32 = arith.constant 0 : i32
    %c8_i32 = arith.constant 8 : i32
    %2 = arith.muli %c0_i32, %c8_i32 : i32
    %3 = tpu.assume_multiple %2, 8 : i32
    %4 = arith.index_cast %3 : i32 to index
    %c0_3 = arith.constant 0 : index
    %5 = vector.load %arg1[%4, %c0_3] : memref<8x128xf32, #tpu.memory_space<vmem>>, vector<8x128xf32>
    %6 = arith.index_cast %3 : i32 to index
    %c0_4 = arith.constant 0 : index
    %7 = vector.load %arg2[%6, %c0_4] : memref<8x128xf32, #tpu.memory_space<vmem>>, vector<8x128xf32>
    %8 = vector.broadcast %cst_1 : f32 to vector<8x128xf32>
    %9 = arith.cmpf olt, %5, %8 : vector<8x128xf32>
    %10 = vector.broadcast %cst_2 : f32 to vector<8x128xf32>
    %11 = arith.select %9, %10, %7 : vector<8x128xi1>, vector<8x128xf32>
    %cst_5 = arith.constant dense<0xFF800000> : vector<8xf32>
    %12 = vector.multi_reduction <maximumf>, %11, %cst_5 [1] : vector<8x128xf32> to vector<8xf32>
    %13 = vector.shape_cast %12 : vector<8xf32> to vector<8x1xf32>
    %14 = vector.broadcast %13 : vector<8x1xf32> to vector<8x128xf32>
    %15 = arith.subf %7, %14 : vector<8x128xf32>
    %16 = math.exp %15 : vector<8x128xf32>
    %cst_6 = arith.constant 0.000000e+00 : f32
    %17 = vector.broadcast %cst_6 : f32 to vector<8x128xf32>
    %18 = arith.select %9, %17, %16 : vector<8x128xi1>, vector<8x128xf32>
    %cst_7 = arith.constant dense<0.000000e+00> : vector<8x128xf32>
    %19 = tpu.matmul %18, %0, %cst_7 {dimension_numbers = #tpu.dot_dimension_numbers<[1], [0], [0], [1], [0, 0, 1, 1], [], []>} : vector<8x128xf32>, vector<128x128xf32>, vector<8x128xf32> -> vector<8x128xf32>
    %cst_8 = arith.constant 1.000000e-07 : f32
    %20 = vector.broadcast %cst_8 : f32 to vector<8x128xf32>
    %21 = arith.addf %19, %20 : vector<8x128xf32>
    %22 = math.log %21 : vector<8x128xf32>
    %23 = arith.subf %22, %15 : vector<8x128xf32>
    %cst_9 = arith.constant 0.000000e+00 : f32
    %24 = vector.broadcast %cst_9 : f32 to vector<8x128xf32>
    %25 = arith.select %9, %24, %23 : vector<8x128xi1>, vector<8x128xf32>
    %cst_10 = arith.constant dense<0.000000e+00> : vector<128xf32>
    %26 = vector.multi_reduction <add>, %25, %cst_10 [0] : vector<8x128xf32> to vector<128xf32>
    %27 = vector.shape_cast %26 : vector<128xf32> to vector<1x128xf32>
    %28 = arith.addf %1, %27 : vector<1x128xf32>
    %c1_i32 = arith.constant 1 : i32
    %c0_11 = arith.constant 0 : index
    %c0_12 = arith.constant 0 : index
    %29 = vector.load %arg4[%c0_11, %c0_12] : memref<1x128xf32, #tpu.memory_space<vmem>>, vector<1x128xf32>
    tpu.vector_store %arg4[%c0_11, %c0_12], %28 {strides = array<i32>} : memref<1x128xf32, #tpu.memory_space<vmem>>, vector<1x128xf32>,
    return
  }
  func.func @transform_0(%arg0: i32) -> (i32, i32) {
    %c0_i32 = arith.constant 0 : i32
    %c0_i32_0 = arith.constant 0 : i32
    return %arg0, %c0_i32 : i32, i32
  }
  func.func @transform_1(%arg0: i32) -> (i32, i32) {
    %c0_i32 = arith.constant 0 : i32
    %c0_i32_0 = arith.constant 0 : i32
    return %arg0, %c0_i32 : i32, i32
  }
  func.func @transform_2(%arg0: i32) -> (i32, i32) {
    %c0_i32 = arith.constant 0 : i32
    %c0_i32_0 = arith.constant 0 : i32
    %c0_i32_1 = arith.constant 0 : i32
    return %c0_i32, %c0_i32_0 : i32, i32
  }
  func.func @transform_3(%arg0: i32) -> (i32, i32) {
    %c0_i32 = arith.constant 0 : i32
    %c0_i32_0 = arith.constant 0 : i32
    return %arg0, %c0_i32 : i32, i32
  }
}

</mosaic_0001>

<llo_original>
// kernel: tpu_custom_call.1
$region0: #{tpu_custom_call.1}
  #allocation0 [shape = 'u32[]', space=smem, size = 0x4, offset = 0x4, fixed_abs, tag = 'smem constant byte address 0x4 - core index']
  #allocation1 [shape = 'u32[72,128]{1,0:T(1,128)}', space=vmem, size = 0x9000, scoped, tag = 'internal scratch']
  %s0 = inlined_call_operand.hbm [shape: f32[8,128], index: 0, kind: input, shape index: {}]
  %s1 = inlined_call_operand.hbm [shape: f32[8,128], index: 1, kind: input, shape index: {}]
  %s2 = inlined_call_operand.hbm [shape: f32[128,128], index: 2, kind: input, shape index: {}]
  %s3 = inlined_call_operand.hbm [shape: f32[1,128], index: 3, kind: output, shape index: {}]
  %s4 = sld [smem:[#allocation0]]
  $region34: #{tpu_custom_call.1} parent=0
    _
  %s6 = ssub.s32 1, %s4
  %s7 = scalar_select 0, %s6, %s4
  $region1: #{tpu_custom_call.1} parent=0
    #allocation2 [shape = 'u8[4096]{0}', space=vmem, size = 0x1000, scoped, tag = 'input window, operand 0, single buffered']
    #allocation3 [shape = 's32[1]{0}', space=sflag, size = 0x4, scoped, tag = 'scoped memory for tpu_custom_call.1']
    #allocation4 [shape = 's32[1]{0}', space=sflag, size = 0x4, scoped, tag = 'scoped memory for tpu_custom_call.1']
    #allocation5 [shape = 'u8[4096]{0}', space=vmem, size = 0x1000, scoped, tag = 'input window, operand 1, single buffered']
    #allocation6 [shape = 's32[1]{0}', space=sflag, size = 0x4, scoped, tag = 'scoped memory for tpu_custom_call.1']
    #allocation7 [shape = 'u8[65536]{0}', space=vmem, size = 0x10000, scoped, tag = 'input window, operand 2, single buffered']
    #allocation8 [shape = 'u8[512]{0}', space=vmem, size = 0x400, scoped, tag = 'output window, operand 0, single buffered']
    %8 = vsyncpa [#allocation3], 0
    %9 = vsyncpa [#allocation6], 0
    %10 = vsyncpa [#allocation4], 0
    // Predicated region
    $region2: #{tpu_custom_call.1} parent=1 // pred_check
      _
    $region3: #{tpu_custom_call.1} parent=1 // pred_check_branch
      %12 = sbr.rel (0) target = $region5
    $region4: #{tpu_custom_call.1} parent=1 // pred_region
      %14 = vsyncadd [#allocation3], 0
      %s16 = sshll.u32 %s0, 4
      %s17 = int_to_ptr.hbm [resolvable:$true] %s16
      %s18 = sshll.u32 [#allocation2], 4
      %s19 = int_to_ptr.vmem [resolvable:$true] %s18
      %21 = dma.hbm_to_vmem [thread:$0]  %s17, 128, %s19, [#allocation3]
    $region5: #{tpu_custom_call.1} parent=1 // pred_fallthru
      _
    // Predicated region
    $region6: #{tpu_custom_call.1} parent=1 // pred_check
      _
    $region7: #{tpu_custom_call.1} parent=1 // pred_check_branch
      %23 = sbr.rel (0) target = $region9
    $region8: #{tpu_custom_call.1} parent=1 // pred_region
      %25 = vsyncadd [#allocation6], 0
      %s27 = sshll.u32 %s1, 4
      %s28 = int_to_ptr.hbm [resolvable:$true] %s27
      %s29 = sshll.u32 [#allocation5], 4
      %s30 = int_to_ptr.vmem [resolvable:$true] %s29
      %32 = dma.hbm_to_vmem [thread:$0]  %s28, 128, %s30, [#allocation6]
    $region9: #{tpu_custom_call.1} parent=1 // pred_fallthru
      _
    // Predicated region
    $region10: #{tpu_custom_call.1} parent=1 // pred_check
      _
    $region11: #{tpu_custom_call.1} parent=1 // pred_check_branch
      %34 = sbr.rel (0) target = $region13
    $region12: #{tpu_custom_call.1} parent=1 // pred_region
      %36 = vsyncadd [#allocation6], 0
      %s37 = sshll.u32 %s2, 4
      %s38 = int_to_ptr.hbm [resolvable:$true] %s37
      %s39 = sshll.u32 [#allocation7], 4
      %s40 = int_to_ptr.vmem [resolvable:$true] %s39
      %45 = dma.hbm_to_vmem [thread:$0]  %s38, 2048, %s40, [#allocation6], 128, 128, 8
    $region13: #{tpu_custom_call.1} parent=1 // pred_fallthru
      _
    // Predicated region
    $region14: #{tpu_custom_call.1} parent=1 // pred_check
      _
    $region15: #{tpu_custom_call.1} parent=1 // pred_check_branch
      %47 = sbr.rel (0) target = $region17
    $region16: #{tpu_custom_call.1} parent=1 // pred_region
      %49 = dma.done [#allocation3], 128
    $region17: #{tpu_custom_call.1} parent=1 // pred_fallthru
      _
    // Predicated region
    $region18: #{tpu_custom_call.1} parent=1 // pred_check
      _
    $region19: #{tpu_custom_call.1} parent=1 // pred_check_branch
      %51 = sbr.rel (0) target = $region21
    $region20: #{tpu_custom_call.1} parent=1 // pred_region
      %53 = dma.done [#allocation6], 128
    $region21: #{tpu_custom_call.1} parent=1 // pred_fallthru
      _
    // Predicated region
    $region22: #{tpu_custom_call.1} parent=1 // pred_check
      _
    $region23: #{tpu_custom_call.1} parent=1 // pred_check_branch
      %55 = sbr.rel (0) target = $region25
    $region24: #{tpu_custom_call.1} parent=1 // pred_region
      %57 = dma.done [#allocation6], 2048
    $region25: #{tpu_custom_call.1} parent=1 // pred_fallthru
      _
    %v58 = vld [vmem:[#allocation7] sm:$0xff]
    %v59 = vld [vmem:[#allocation7 + $0x8] sm:$0xff]
    %v60 = vld [vmem:[#allocation7 + $0x10] sm:$0xff]
    %v61 = vld [vmem:[#allocation7 + $0x18] sm:$0xff]
    %v62 = vld [vmem:[#allocation7 + $0x20] sm:$0xff]
    %v63 = vld [vmem:[#allocation7 + $0x28] sm:$0xff]
    %v64 = vld [vmem:[#allocation7 + $0x30] sm:$0xff]
    %v65 = vld [vmem:[#allocation7 + $0x38] sm:$0xff]
    %v66 = vld [vmem:[#allocation7 + $0x40] sm:$0xff]
    %v67 = vld [vmem:[#allocation7 + $0x48] sm:$0xff]
    %v68 = vld [vmem:[#allocation7 + $0x50] sm:$0xff]
    %v69 = vld [vmem:[#allocation7 + $0x58] sm:$0xff]
    %v70 = vld [vmem:[#allocation7 + $0x60] sm:$0xff]
    %v71 = vld [vmem:[#allocation7 + $0x68] sm:$0xff]
    %v72 = vld [vmem:[#allocation7 + $0x70] sm:$0xff]
    %v73 = vld [vmem:[#allocation7 + $0x78] sm:$0xff]
    %v74 = vld [vmem:[#allocation2] sm:$0xff]
    %v75 = vld [vmem:[#allocation5] sm:$0xff]
    %vm76 = vcmp.lt.f32.partialorder %v74, -20.0
    %v77 = vsel %vm76, -1e+30, %v75
    %78 = vmax.xlane.f32.xlu0 %v77
    %v79 = vpop.xlane.xlu0 %78
    %v80 = vsub.f32 %v75, %v79
    %v81 = vmul.f32 %v80, 1.442695
    %v82 = vpow.pop %v81
    %v83 = vsel %vm76, 0.0, %v82
    %84 = vmatpush.msra.mxu0 %v73
    %85 = vmatpush.msra.mxu0 %v72
    %86 = vmatpush.msra.mxu0 %v71
    %87 = vmatpush.msra.mxu0 %v70
    %88 = vmatpush.msra.mxu0 %v69
    %89 = vmatpush.msra.mxu0 %v68
    %90 = vmatpush.msra.mxu0 %v67
    %91 = vmatpush.msra.mxu0 %v66
    %92 = vmatpush.msra.mxu0 %v65
    %93 = vmatpush.msra.mxu0 %v64
    %94 = vmatpush.msra.mxu0 %v63
    %95 = vmatpush.msra.mxu0 %v62
    %96 = vmatpush.msra.mxu0 %v61
    %97 = vmatpush.msra.mxu0 %v60
    %98 = vmatpush.msra.mxu0 %v59
    %99 = vmatpush.msra.mxu0 %v58
    %100 = vmatmul.f32.gmra.mxu0 %v83
    %v101 = vpop.f32.mrf.mxu0
    %v102 = vadd.f32 1e-07, %v101
    %103 = vdwg.mxu0
    %v104 = vlog2.pop %v102
    %v105 = vmul.f32 %v104, 0.6931472
    %v106 = vsub.f32 %v105, %v80
    %v107 = vsel %vm76, 0.0, %v106
    %v108 = vrot.slane %v107, 4
    %v109 = vadd.f32 %v107, %v108
    %v110 = vrot.slane %v109, 2
    %v111 = vadd.f32 %v109, %v110
    %v112 = vrot.slane %v111, 1
    %v113 = vadd.f32 %v111, %v112
    %v114 = vadd.f32 %v113, 0.0
    %115 = vst [vmem:[#allocation8] sm:$0x1] %v114
    // Predicated region
    $region26: #{tpu_custom_call.1} parent=1 // pred_check
      _
    $region27: #{tpu_custom_call.1} parent=1 // pred_check_branch
      %117 = sbr.rel (0) target = $region29
    $region28: #{tpu_custom_call.1} parent=1 // pred_region
      %119 = vsyncadd [#allocation4], 0
      %s121 = sshll.u32 [#allocation8], 4
      %s122 = int_to_ptr.vmem [resolvable:$true] %s121
      %s123 = sshll.u32 %s3, 4
      %s124 = int_to_ptr.hbm [resolvable:$true] %s123
      %126 = dma.vmem_to_hbm [thread:$0]  %s122, 16, %s124, [#allocation4]
    $region29: #{tpu_custom_call.1} parent=1 // pred_fallthru
      _
    // Predicated region
    $region30: #{tpu_custom_call.1} parent=1 // pred_check
      _
    $region31: #{tpu_custom_call.1} parent=1 // pred_check_branch
      %128 = sbr.rel (0) target = $region33
    $region32: #{tpu_custom_call.1} parent=1 // pred_region
      %130 = dma.done [#allocation4], 16
    $region33: #{tpu_custom_call.1} parent=1 // pred_fallthru
      _
    %131 = vsyncpa [#allocation3], 1
    %132 = vsyncpa [#allocation6], 1
    %133 = vsyncpa [#allocation4], 1

</llo_original>
